<compile_context>
chip_gen: v7x
topology: tpu7x:2x2x1
jax: 0.10.0
libtpu: 0.0.40
codegen_flags: <defaults>
</compile_context>

<pallas_src>
import jax
import jax.numpy as jnp
from jax.experimental import pallas as pl
from jax.experimental.pallas import tpu as pltpu


def _pg_mlp_kernel(x_ref, w0_ref, b0_ref, w1_ref, b1_ref, w2_ref, b2_ref,
                   o_ref):
    """One batch-tile of the PG forward pass.

    hidden = relu(x @ W0 + b0)
    hidden = relu(hidden @ W1 + b1)
    logits = hidden @ W2 + b2
    out    = softmax(logits, axis=-1)
    """
    wdt = w0_ref.dtype  # MXU compute dtype (bf16 on all generations)

    # In-kernel cast: x arrives as f32 over the DMA; the convert is a free
    # VPU op hidden under the pipeline (no separate wrapper-side HLO).
    x = x_ref[...].astype(wdt)

    # Layer 0 + ReLU (f32 accumulation on the MXU)
    h = jnp.dot(x, w0_ref[...], preferred_element_type=jnp.float32)
    h = jnp.maximum(h + b0_ref[...], 0.0)

    # Layer 1 + ReLU
    h = jnp.dot(h.astype(wdt), w1_ref[...], preferred_element_type=jnp.float32)
    h = jnp.maximum(h + b1_ref[...], 0.0)

    # Output layer + row softmax, all in f32
    logits = jnp.dot(h.astype(wdt), w2_ref[...],
                     preferred_element_type=jnp.float32)
    logits = logits + b2_ref[...]

    m = jnp.max(logits, axis=-1, keepdims=True)
    e = jnp.exp(logits - m)
    denom = jnp.sum(e, axis=-1, keepdims=True)
    # Exact reciprocal: keeps row sums == 1 to f32 precision for downstream
    # Categorical sampling; cost is negligible (bt elements per step).
    o_ref[...] = (e * pl.reciprocal(denom, approx=False)).astype(o_ref.dtype)


def _detect_num_tc():
    """2 TensorCores per chip on v7x, 1 on v5e/v6e (and unknown chips)."""
    try:
        kind = jax.devices()[0].device_kind.lower()
        return 2 if "v7" in kind else 1
    except Exception:
        return 1


def _pick_batch_tile(B, *, num_tc=1, cap=4096):
    """Pick the rows-per-grid-step tile.

    1 TC  : single step whenever the whole batch fits the cap (removes all
            per-step overhead); otherwise the largest multiple-of-8 divisor.
    2 TCs : largest multiple-of-8 divisor giving an even number (>=2) of
            grid steps so the "parallel" batch axis shards evenly across
            both TensorCores.
    """
    if B <= 8:
        return B
    if num_tc <= 1:
        if B <= cap and B % 8 == 0:
            return B
        best = None
        for bt in range(8, min(B, cap) + 1, 8):
            if B % bt == 0:
                best = bt
        return best if best is not None else B
    # num_tc >= 2: prefer an even step count >= 2
    best = None
    for bt in range(8, min(B // 2, cap) + 1, 8):
        if B % bt == 0 and (B // bt) % 2 == 0:
            best = bt
    if best is None:
        for bt in range(8, min(B, cap) + 1, 8):
            if B % bt == 0:
                best = bt
    return best if best is not None else B


def prepare_pg_params(params, compute_dtype=jnp.bfloat16):
    """One-time weight preparation (hoisted out of the per-call path).

    Casts weights to the MXU compute dtype and reshapes biases to (1, out)
    f32 rows for lane-major broadcasting.
    """
    assert len(params) == 3, "this kernel is specialized for 2 hidden layers"
    (w0, b0), (w1, b1), (w2, b2) = params
    return (
        w0.astype(compute_dtype), b0.reshape(1, -1).astype(jnp.float32),
        w1.astype(compute_dtype), b1.reshape(1, -1).astype(jnp.float32),
        w2.astype(compute_dtype), b2.reshape(1, -1).astype(jnp.float32),
    )


def pg_forward(x, prepped, *, batch_tile=None, num_tc=None):
    """Forward pass of PG as a single fused Pallas TPU kernel.

    Args:
      x: (B, D_in) float32 observations (cast to the compute dtype in-kernel).
      prepped: output of prepare_pg_params (3 weight/bias pairs, flattened).
      batch_tile: rows per grid step (auto-chosen if None).
      num_tc: number of TensorCores to target (auto-detected if None).
    Returns:
      (B, D_out) float32 action probabilities (rows sum to 1).
    """
    w0, b0, w1, b1, w2, b2 = prepped
    B, D_in = x.shape
    H0, H1, D_out = w0.shape[1], w1.shape[1], w2.shape[1]
    assert w0.shape[0] == D_in and w1.shape[0] == H0 and w2.shape[0] == H1

    if num_tc is None:
        num_tc = _detect_num_tc()
    bt = _pick_batch_tile(B, num_tc=num_tc) if batch_tile is None else batch_tile
    assert B % bt == 0
    # (8,128) BlockSpec rule: second-minor block dim must be a multiple of 8
    # or the full array extent; the last dim of every block here equals the
    # full array extent (D_in / H / D_out), which is always legal.
    assert bt % 8 == 0 or bt == B
    grid = (B // bt,)

    # Weights / biases are small with constant index_maps -> resident.
    full = lambda shape: pl.BlockSpec(shape, lambda i: (0, 0))

    wsize = jnp.dtype(w0.dtype).itemsize
    cost = pl.CostEstimate(
        flops=2 * B * (D_in * H0 + H0 * H1 + H1 * D_out),
        transcendentals=B * D_out,
        bytes_accessed=(B * D_in * jnp.dtype(x.dtype).itemsize   # x stream
                        + B * D_out * 4                          # output stream
                        + (D_in * H0 + H0 * H1 + H1 * D_out) * wsize
                        + (H0 + H1 + D_out) * 4),                # biases
    )

    return pl.pallas_call(
        _pg_mlp_kernel,
        out_shape=jax.ShapeDtypeStruct((B, D_out), jnp.float32),
        grid_spec=pltpu.PrefetchScalarGridSpec(
            num_scalar_prefetch=0,
            grid=grid,
            in_specs=[
                pl.BlockSpec((bt, D_in), lambda i: (i, 0)),   # x tile
                full((D_in, H0)), full((1, H0)),
                full((H0, H1)),   full((1, H1)),
                full((H1, D_out)), full((1, D_out)),
            ],
            out_specs=pl.BlockSpec((bt, D_out), lambda i: (i, 0)),
        ),
        compiler_params=pltpu.CompilerParams(
            dimension_semantics=("parallel",)),
        cost_estimate=cost,
    )(x, w0, b0, w1, b1, w2, b2)


def init_pg_params(key, d_in, hidden, d_out):
    """Deterministic init matching torch.nn.Linear's U(-1/sqrt(fan_in), ...)."""
    dims = [d_in] + list(hidden) + [d_out]
    params = []
    for i in range(len(dims) - 1):
        key, kw, kb = jax.random.split(key, 3)
        fan_in, fan_out = dims[i], dims[i + 1]
        bound = 1.0 / jnp.sqrt(jnp.float32(fan_in))
        w = jax.random.uniform(kw, (fan_in, fan_out), jnp.float32,
                               minval=-bound, maxval=bound)
        b = jax.random.uniform(kb, (fan_out,), jnp.float32,
                               minval=-bound, maxval=bound)
        params.append((w, b))
    return params


def pg_forward_ref(x, params):
    """Pure-JAX f32 reference for correctness checking."""
    h = x
    n = len(params)
    for i, (w, b) in enumerate(params):
        h = h @ w + b
        if i != n - 1:
            h = jnp.maximum(h, 0.0)
        else:
            h = jax.nn.softmax(h, axis=-1)
    return h


# TODO(synk): PG.train / sample_action / ReplayMemory / Adam / Categorical are
# host-side RL plumbing with no Pallas-kernel equivalent; only forward() is
# implemented here.

if __name__ == "__main__":
    # PG(D_in=16, H=[32, 32], D_out=8) on a batch of 256 observations.
    B, D_in, H, D_out = 256, 16, (32, 32), 8

    key = jax.random.PRNGKey(0)
    key, kx = jax.random.split(key)
    x = jax.random.normal(kx, (B, D_in), dtype=jnp.float32)
    params = init_pg_params(key, D_in, H, D_out)

    # bf16 MXU inputs on all generations (MXU is bf16-native everywhere);
    # accumulation / bias / softmax remain f32 inside the kernel.
    prepped = prepare_pg_params(params, compute_dtype=jnp.bfloat16)

    probs = pg_forward(x, prepped)
    probs = jax.block_until_ready(probs)

    ref = pg_forward_ref(x, params)
    assert probs.shape == (B, D_out)
    assert jnp.allclose(probs, ref, atol=5e-2, rtol=5e-2)
    # Softmax normalization is computed in f32 with an exact reciprocal
    # -> rows sum to 1 tightly even though the matmul inputs are bf16.
    assert jnp.allclose(jnp.sum(probs, axis=-1), 1.0, atol=1e-5)

    print("KERNEL_OK")
</pallas_src>

<mosaic_0001>
module attributes {stable_mosaic.version = 11 : i64} {
  func.func @_pg_mlp_kernel(%arg0: i32, %arg1: memref<256x16xf32, #tpu.memory_space<vmem>>, %arg2: memref<16x32xbf16, #tpu.memory_space<vmem>>, %arg3: memref<1x32xf32, #tpu.memory_space<vmem>>, %arg4: memref<32x32xbf16, #tpu.memory_space<vmem>>, %arg5: memref<1x32xf32, #tpu.memory_space<vmem>>, %arg6: memref<32x8xbf16, #tpu.memory_space<vmem>>, %arg7: memref<1x8xf32, #tpu.memory_space<vmem>>, %arg8: memref<256x8xf32, #tpu.memory_space<vmem>>) attributes {dimension_semantics = [#tpu.dimension_semantics<parallel>], iteration_bounds = array<i64: 1>, scalar_prefetch = 0 : i64, scratch_operands = 0 : i64, tpu.core_type = #tpu.core_type<tc>, window_params = [{transform_indices = @transform_0, window_bounds = array<i64: 256, 16>}, {pipeline_mode = #tpu.pipeline_mode<synchronous>, transform_indices = @transform_1, window_bounds = array<i64: 16, 32>}, {pipeline_mode = #tpu.pipeline_mode<synchronous>, transform_indices = @transform_2, window_bounds = array<i64: 1, 32>}, {pipeline_mode = #tpu.pipeline_mode<synchronous>, transform_indices = @transform_3, window_bounds = array<i64: 32, 32>}, {pipeline_mode = #tpu.pipeline_mode<synchronous>, transform_indices = @transform_4, window_bounds = array<i64: 1, 32>}, {pipeline_mode = #tpu.pipeline_mode<synchronous>, transform_indices = @transform_5, window_bounds = array<i64: 32, 8>}, {pipeline_mode = #tpu.pipeline_mode<synchronous>, transform_indices = @transform_6, window_bounds = array<i64: 1, 8>}, {transform_indices = @transform_7, window_bounds = array<i64: 256, 8>}]} {
    %c0 = arith.constant 0 : index
    %c0_0 = arith.constant 0 : index
    %0 = vector.load %arg1[%c0, %c0_0] : memref<256x16xf32, #tpu.memory_space<vmem>>, vector<256x16xf32>
    %1 = arith.truncf %0 : vector<256x16xf32> to vector<256x16xbf16>
    %c0_1 = arith.constant 0 : index
    %c0_2 = arith.constant 0 : index
    %2 = vector.load %arg2[%c0_1, %c0_2] : memref<16x32xbf16, #tpu.memory_space<vmem>>, vector<16x32xbf16>
    %cst = arith.constant dense<0.000000e+00> : vector<256x32xf32>
    %3 = tpu.matmul %1, %2, %cst {dimension_numbers = #tpu.dot_dimension_numbers<[1], [0], [0], [1], [0, 0, 1, 1], [], []>} : vector<256x16xbf16>, vector<16x32xbf16>, vector<256x32xf32> -> vector<256x32xf32>
    %c0_3 = arith.constant 0 : index
    %c0_4 = arith.constant 0 : index
    %4 = vector.load %arg3[%c0_3, %c0_4] : memref<1x32xf32, #tpu.memory_space<vmem>>, vector<1x32xf32>
    %5 = vector.broadcast %4 : vector<1x32xf32> to vector<256x32xf32>
    %6 = arith.addf %3, %5 : vector<256x32xf32>
    %cst_5 = arith.constant 0.000000e+00 : f32
    %7 = vector.broadcast %cst_5 : f32 to vector<256x32xf32>
    %8 = arith.maximumf %6, %7 : vector<256x32xf32>
    %9 = arith.truncf %8 : vector<256x32xf32> to vector<256x32xbf16>
    %c0_6 = arith.constant 0 : index
    %c0_7 = arith.constant 0 : index
    %10 = vector.load %arg4[%c0_6, %c0_7] : memref<32x32xbf16, #tpu.memory_space<vmem>>, vector<32x32xbf16>
    %cst_8 = arith.constant dense<0.000000e+00> : vector<256x32xf32>
    %11 = tpu.matmul %9, %10, %cst_8 {dimension_numbers = #tpu.dot_dimension_numbers<[1], [0], [0], [1], [0, 0, 1, 1], [], []>} : vector<256x32xbf16>, vector<32x32xbf16>, vector<256x32xf32> -> vector<256x32xf32>
    %c0_9 = arith.constant 0 : index
    %c0_10 = arith.constant 0 : index
    %12 = vector.load %arg5[%c0_9, %c0_10] : memref<1x32xf32, #tpu.memory_space<vmem>>, vector<1x32xf32>
    %13 = vector.broadcast %12 : vector<1x32xf32> to vector<256x32xf32>
    %14 = arith.addf %11, %13 : vector<256x32xf32>
    %cst_11 = arith.constant 0.000000e+00 : f32
    %15 = vector.broadcast %cst_11 : f32 to vector<256x32xf32>
    %16 = arith.maximumf %14, %15 : vector<256x32xf32>
    %17 = arith.truncf %16 : vector<256x32xf32> to vector<256x32xbf16>
    %c0_12 = arith.constant 0 : index
    %c0_13 = arith.constant 0 : index
    %18 = vector.load %arg6[%c0_12, %c0_13] : memref<32x8xbf16, #tpu.memory_space<vmem>>, vector<32x8xbf16>
    %cst_14 = arith.constant dense<0.000000e+00> : vector<256x8xf32>
    %19 = tpu.matmul %17, %18, %cst_14 {dimension_numbers = #tpu.dot_dimension_numbers<[1], [0], [0], [1], [0, 0, 1, 1], [], []>} : vector<256x32xbf16>, vector<32x8xbf16>, vector<256x8xf32> -> vector<256x8xf32>
    %c0_15 = arith.constant 0 : index
    %c0_16 = arith.constant 0 : index
    %20 = vector.load %arg7[%c0_15, %c0_16] : memref<1x8xf32, #tpu.memory_space<vmem>>, vector<1x8xf32>
    %21 = vector.broadcast %20 : vector<1x8xf32> to vector<256x8xf32>
    %22 = arith.addf %19, %21 : vector<256x8xf32>
    %cst_17 = arith.constant dense<0xFF800000> : vector<256xf32>
    %23 = vector.multi_reduction <maximumf>, %22, %cst_17 [1] : vector<256x8xf32> to vector<256xf32>
    %24 = vector.shape_cast %23 : vector<256xf32> to vector<256x1xf32>
    %25 = vector.broadcast %24 : vector<256x1xf32> to vector<256x8xf32>
    %26 = arith.subf %22, %25 : vector<256x8xf32>
    %27 = math.exp %26 : vector<256x8xf32>
    %cst_18 = arith.constant dense<0.000000e+00> : vector<256xf32>
    %28 = vector.multi_reduction <add>, %27, %cst_18 [1] : vector<256x8xf32> to vector<256xf32>
    %29 = vector.shape_cast %28 : vector<256xf32> to vector<256x1xf32>
    %30 = tpu.reciprocal %29 : vector<256x1xf32> -> vector<256x1xf32>
    %31 = vector.broadcast %30 : vector<256x1xf32> to vector<256x8xf32>
    %32 = arith.mulf %27, %31 : vector<256x8xf32>
    %c0_19 = arith.constant 0 : index
    %c0_20 = arith.constant 0 : index
    %33 = vector.load %arg8[%c0_19, %c0_20] : memref<256x8xf32, #tpu.memory_space<vmem>>, vector<256x8xf32>
    tpu.vector_store %arg8[%c0_19, %c0_20], %32 {strides = array<i32>} : memref<256x8xf32, #tpu.memory_space<vmem>>, vector<256x8xf32>,
    return
  }
  func.func @transform_0(%arg0: i32) -> (i32, i32) {
    %c0_i32 = arith.constant 0 : i32
    %c0_i32_0 = arith.constant 0 : i32
    return %arg0, %c0_i32 : i32, i32
  }
  func.func @transform_1(%arg0: i32) -> (i32, i32) {
    %c0_i32 = arith.constant 0 : i32
    %c0_i32_0 = arith.constant 0 : i32
    %c0_i32_1 = arith.constant 0 : i32
    return %c0_i32, %c0_i32_0 : i32, i32
  }
  func.func @transform_2(%arg0: i32) -> (i32, i32) {
    %c0_i32 = arith.constant 0 : i32
    %c0_i32_0 = arith.constant 0 : i32
    %c0_i32_1 = arith.constant 0 : i32
    return %c0_i32, %c0_i32_0 : i32, i32
  }
  func.func @transform_3(%arg0: i32) -> (i32, i32) {
    %c0_i32 = arith.constant 0 : i32
    %c0_i32_0 = arith.constant 0 : i32
    %c0_i32_1 = arith.constant 0 : i32
    return %c0_i32, %c0_i32_0 : i32, i32
  }
  func.func @transform_4(%arg0: i32) -> (i32, i32) {
    %c0_i32 = arith.constant 0 : i32
    %c0_i32_0 = arith.constant 0 : i32
    %c0_i32_1 = arith.constant 0 : i32
    return %c0_i32, %c0_i32_0 : i32, i32
  }
  func.func @transform_5(%arg0: i32) -> (i32, i32) {
    %c0_i32 = arith.constant 0 : i32
    %c0_i32_0 = arith.constant 0 : i32
    %c0_i32_1 = arith.constant 0 : i32
    return %c0_i32, %c0_i32_0 : i32, i32
  }
  func.func @transform_6(%arg0: i32) -> (i32, i32) {
    %c0_i32 = arith.constant 0 : i32
    %c0_i32_0 = arith.constant 0 : i32
    %c0_i32_1 = arith.constant 0 : i32
    return %c0_i32, %c0_i32_0 : i32, i32
  }
  func.func @transform_7(%arg0: i32) -> (i32, i32) {
    %c0_i32 = arith.constant 0 : i32
    %c0_i32_0 = arith.constant 0 : i32
    return %arg0, %c0_i32 : i32, i32
  }
}

</mosaic_0001>

<llo_original>
// kernel: tpu_custom_call.1
$region0: #{tpu_custom_call.1}
  #allocation0 [shape = 'u32[]', space=smem, size = 0x4, offset = 0x4, fixed_abs, tag = 'smem constant byte address 0x4 - core index']
  #allocation1 [shape = 'u32[144,128]{1,0:T(1,128)}', space=vmem, size = 0x12000, scoped, tag = 'internal scratch']
  %s0 = inlined_call_operand.vmem [shape: f32[256,16], index: 0, kind: input, shape index: {}]
  %s1 = inlined_call_operand.vmem [shape: bf16[16,32], index: 1, kind: input, shape index: {}]
  %s2 = inlined_call_operand.vmem [shape: f32[1,32], index: 2, kind: input, shape index: {}]
  %s3 = inlined_call_operand.vmem [shape: bf16[32,32], index: 3, kind: input, shape index: {}]
  %s4 = inlined_call_operand.vmem [shape: f32[1,32], index: 4, kind: input, shape index: {}]
  %s5 = inlined_call_operand.vmem [shape: bf16[32,8], index: 5, kind: input, shape index: {}]
  %s6 = inlined_call_operand.vmem [shape: f32[1,8], index: 6, kind: input, shape index: {}]
  %s7 = inlined_call_operand.vmem [shape: f32[256,8], index: 7, kind: output, shape index: {}]
  %s8 = sld [smem:[#allocation0]]
  $region38: #{tpu_custom_call.1} parent=0
    _
  %s10 = ssub.s32 1, %s8
  %s11 = scalar_select 0, %s10, %s8
  // Predicated region
  $region2: #{tpu_custom_call.1} parent=0 // pred_check
    _
  $region3: #{tpu_custom_call.1} parent=0 // pred_check_branch
    %13 = sbr.rel (0) target = $region5
  $region4: #{tpu_custom_call.1} parent=0 // pred_region
    _
  $region5: #{tpu_custom_call.1} parent=0 // pred_fallthru
    _
  // Predicated region
  $region6: #{tpu_custom_call.1} parent=0 // pred_check
    _
  $region7: #{tpu_custom_call.1} parent=0 // pred_check_branch
    %15 = sbr.rel (0) target = $region9
  $region8: #{tpu_custom_call.1} parent=0 // pred_region
    _
  $region9: #{tpu_custom_call.1} parent=0 // pred_fallthru
    _
  // Predicated region
  $region10: #{tpu_custom_call.1} parent=0 // pred_check
    _
  $region11: #{tpu_custom_call.1} parent=0 // pred_check_branch
    %17 = sbr.rel (0) target = $region13
  $region12: #{tpu_custom_call.1} parent=0 // pred_region
    _
  $region13: #{tpu_custom_call.1} parent=0 // pred_fallthru
    _
  // Predicated region
  $region14: #{tpu_custom_call.1} parent=0 // pred_check
    _
  $region15: #{tpu_custom_call.1} parent=0 // pred_check_branch
    %19 = sbr.rel (0) target = $region17
  $region16: #{tpu_custom_call.1} parent=0 // pred_region
    _
  $region17: #{tpu_custom_call.1} parent=0 // pred_fallthru
    _
  // Predicated region
  $region18: #{tpu_custom_call.1} parent=0 // pred_check
    _
  $region19: #{tpu_custom_call.1} parent=0 // pred_check_branch
    %21 = sbr.rel (0) target = $region21
  $region20: #{tpu_custom_call.1} parent=0 // pred_region
    _
  $region21: #{tpu_custom_call.1} parent=0 // pred_fallthru
    _
  // Predicated region
  $region22: #{tpu_custom_call.1} parent=0 // pred_check
    _
  $region23: #{tpu_custom_call.1} parent=0 // pred_check_branch
    %23 = sbr.rel (0) target = $region25
  $region24: #{tpu_custom_call.1} parent=0 // pred_region
    _
  $region25: #{tpu_custom_call.1} parent=0 // pred_fallthru
    _
  // Predicated region
  $region26: #{tpu_custom_call.1} parent=0 // pred_check
    _
  $region27: #{tpu_custom_call.1} parent=0 // pred_check_branch
    %25 = sbr.rel (0) target = $region29
  $region28: #{tpu_custom_call.1} parent=0 // pred_region
    _
  $region29: #{tpu_custom_call.1} parent=0 // pred_fallthru
    _
  %v27 = vld [vmem:[%s0] sm:$0xff]
  %v28 = vld [vmem:[%s0 + $0x8] sm:$0xff]
  %v29 = vld [vmem:[%s0 + $0x10] sm:$0xff]
  %v30 = vld [vmem:[%s0 + $0x18] sm:$0xff]
  %v31 = vld [vmem:[%s0 + $0x20] sm:$0xff]
  %v32 = vld [vmem:[%s0 + $0x28] sm:$0xff]
  %v33 = vld [vmem:[%s0 + $0x30] sm:$0xff]
  %v34 = vld [vmem:[%s0 + $0x38] sm:$0xff]
  %v35 = vld [vmem:[%s0 + $0x40] sm:$0xff]
  %v36 = vld [vmem:[%s0 + $0x48] sm:$0xff]
  %v37 = vld [vmem:[%s0 + $0x50] sm:$0xff]
  %v38 = vld [vmem:[%s0 + $0x58] sm:$0xff]
  %v39 = vld [vmem:[%s0 + $0x60] sm:$0xff]
  %v40 = vld [vmem:[%s0 + $0x68] sm:$0xff]
  %v41 = vld [vmem:[%s0 + $0x70] sm:$0xff]
  %v42 = vld [vmem:[%s0 + $0x78] sm:$0xff]
  %v43 = vld [vmem:[%s0 + $0x80] sm:$0xff]
  %v44 = vld [vmem:[%s0 + $0x88] sm:$0xff]
  %v45 = vld [vmem:[%s0 + $0x90] sm:$0xff]
  %v46 = vld [vmem:[%s0 + $0x98] sm:$0xff]
  %v47 = vld [vmem:[%s0 + $0xa0] sm:$0xff]
  %v48 = vld [vmem:[%s0 + $0xa8] sm:$0xff]
  %v49 = vld [vmem:[%s0 + $0xb0] sm:$0xff]
  %v50 = vld [vmem:[%s0 + $0xb8] sm:$0xff]
  %v51 = vld [vmem:[%s0 + $0xc0] sm:$0xff]
  %v52 = vld [vmem:[%s0 + $0xc8] sm:$0xff]
  %v53 = vld [vmem:[%s0 + $0xd0] sm:$0xff]
  %v54 = vld [vmem:[%s0 + $0xd8] sm:$0xff]
  %v55 = vld [vmem:[%s0 + $0xe0] sm:$0xff]
  %v56 = vld [vmem:[%s0 + $0xe8] sm:$0xff]
  %v57 = vld [vmem:[%s0 + $0xf0] sm:$0xff]
  %v58 = vld [vmem:[%s0 + $0xf8] sm:$0xff]
  %v59 = vpack.c.bf16 %v28, %v27
  %v60 = vpack.c.bf16 %v30, %v29
  %v61 = vpack.c.bf16 %v32, %v31
  %v62 = vpack.c.bf16 %v34, %v33
  %v63 = vpack.c.bf16 %v36, %v35
  %v64 = vpack.c.bf16 %v38, %v37
  %v65 = vpack.c.bf16 %v40, %v39
  %v66 = vpack.c.bf16 %v42, %v41
  %v67 = vpack.c.bf16 %v44, %v43
  %v68 = vpack.c.bf16 %v46, %v45
  %v69 = vpack.c.bf16 %v48, %v47
  %v70 = vpack.c.bf16 %v50, %v49
  %v71 = vpack.c.bf16 %v52, %v51
  %v72 = vpack.c.bf16 %v54, %v53
  %v73 = vpack.c.bf16 %v56, %v55
  %v74 = vpack.c.bf16 %v58, %v57
  %v75 = vld [vmem:[%s1] sm:$0xf]
  %v76 = vld [vmem:[%s1 + $0x4] sm:$0xf]
  %v77 = vld [vmem:[%s2] sm:$0x1]
  %v79 = vlaneseq
  %v80 = vshrl.u32 %v79, 7
  %v81 = vsub.s32 0, %v80
  %v82 = vrot.slane %v77, %v81
  %v86 = vunpack.c.l.b16 %v75
  %v87 = vunpack.c.l.b16 %v76
  %v88 = vpack.c.b16 %v87, %v86
  %vm90 = vcmask 130048
  %v92 = vsel %vm90, %v59, 0
  %v95 = vsel %vm90, %v60, 0
  %v98 = vsel %vm90, %v61, 0
  %v101 = vsel %vm90, %v62, 0
  %v104 = vsel %vm90, %v63, 0
  %v107 = vsel %vm90, %v64, 0
  %v110 = vsel %vm90, %v65, 0
  %v113 = vsel %vm90, %v66, 0
  %v116 = vsel %vm90, %v67, 0
  %v119 = vsel %vm90, %v68, 0
  %v122 = vsel %vm90, %v69, 0
  %v125 = vsel %vm90, %v70, 0
  %v128 = vsel %vm90, %v71, 0
  %v131 = vsel %vm90, %v72, 0
  %v134 = vsel %vm90, %v73, 0
  %v137 = vsel %vm90, %v74, 0
  %139 = vmatprep.subr.bf16.mxu0 0
  %140 = vmatpush1.bf16.msra.mxu0 %v88
  %141 = vmatprep.subr.bf16.mxu0 0
  %142 = vmatpush1.bf16.msra.mxu0 0
  %143 = vmatprep.subr.bf16.mxu0 0
  %144 = vmatpush1.bf16.msra.mxu0 0
  %145 = vmatprep.subr.bf16.mxu0 0
  %146 = vmatpush1.bf16.msra.mxu0 0
  %147 = vmatprep.subr.bf16.mxu0 0
  %148 = vmatpush1.bf16.msra.mxu0 0
  %149 = vmatprep.subr.bf16.mxu0 0
  %150 = vmatpush1.bf16.msra.mxu0 0
  %151 = vmatprep.subr.bf16.mxu0 0
  %152 = vmatpush1.bf16.msra.mxu0 0
  %153 = vmatprep.subr.bf16.mxu0 0
  %154 = vmatpush1.bf16.msra.mxu0 0
  %155 = vmatprep.subr.bf16.mxu0 0
  %156 = vmatpush1.bf16.msra.mxu0 0
  %157 = vmatprep.subr.bf16.mxu0 0
  %158 = vmatpush1.bf16.msra.mxu0 0
  %159 = vmatprep.subr.bf16.mxu0 0
  %160 = vmatpush1.bf16.msra.mxu0 0
  %161 = vmatprep.subr.bf16.mxu0 0
  %162 = vmatpush1.bf16.msra.mxu0 0
  %163 = vmatprep.subr.bf16.mxu0 0
  %164 = vmatpush1.bf16.msra.mxu0 0
  %165 = vmatprep.subr.bf16.mxu0 0
  %166 = vmatpush1.bf16.msra.mxu0 0
  %167 = vmatprep.subr.bf16.mxu0 0
  %168 = vmatpush1.bf16.msra.mxu0 0
  %169 = vmatprep.subr.bf16.mxu0 0
  %170 = vmatpush1.bf16.msra.mxu0 0
  %171 = vmatprep.mubr.bf16.mxu0 0
  %172 = vmatmul.mubr.bf16.gmra.mrb[0].mxu0 %v92
  %v173 = vpop.f32.mrb[0].mxu0
  %v174 = vadd.f32 %v82, %v173
  %v175 = vpop.f32.mrb[0].mxu0
  %v176 = vpop.f32.mrb[0].mxu0
  %v177 = vadd.f32 %v82, %v176
  %v178 = vpop.f32.mrb[0].mxu0
  %179 = vmatprep.mubr.bf16.mxu0 0
  %180 = vmatmul.mubr.bf16.gmra.mrb[0].mxu0 %v95
  %v181 = vpop.f32.mrb[0].mxu0
  %v182 = vadd.f32 %v82, %v181
  %v183 = vpop.f32.mrb[0].mxu0
  %v184 = vpop.f32.mrb[0].mxu0
  %v185 = vadd.f32 %v82, %v184
  %v186 = vpop.f32.mrb[0].mxu0
  %187 = vmatprep.mubr.bf16.mxu0 0
  %188 = vmatmul.mubr.bf16.gmra.mrb[0].mxu0 %v98
  %v189 = vpop.f32.mrb[0].mxu0
  %v190 = vadd.f32 %v82, %v189
  %v191 = vpop.f32.mrb[0].mxu0
  %v192 = vpop.f32.mrb[0].mxu0
  %v193 = vadd.f32 %v82, %v192
  %v194 = vpop.f32.mrb[0].mxu0
  %195 = vmatprep.mubr.bf16.mxu0 0
  %196 = vmatmul.mubr.bf16.gmra.mrb[0].mxu0 %v101
  %v197 = vpop.f32.mrb[0].mxu0
  %v198 = vadd.f32 %v82, %v197
  %v199 = vpop.f32.mrb[0].mxu0
  %v200 = vpop.f32.mrb[0].mxu0
  %v201 = vadd.f32 %v82, %v200
  %v202 = vpop.f32.mrb[0].mxu0
  %203 = vmatprep.mubr.bf16.mxu0 0
  %204 = vmatmul.mubr.bf16.gmra.mrb[0].mxu0 %v104
  %v205 = vpop.f32.mrb[0].mxu0
  %v206 = vadd.f32 %v82, %v205
  %v207 = vpop.f32.mrb[0].mxu0
  %v208 = vpop.f32.mrb[0].mxu0
  %v209 = vadd.f32 %v82, %v208
  %v210 = vpop.f32.mrb[0].mxu0
  %211 = vmatprep.mubr.bf16.mxu0 0
  %212 = vmatmul.mubr.bf16.gmra.mrb[0].mxu0 %v107
  %v213 = vpop.f32.mrb[0].mxu0
  %v214 = vadd.f32 %v82, %v213
  %v215 = vpop.f32.mrb[0].mxu0
  %v216 = vpop.f32.mrb[0].mxu0
  %v217 = vadd.f32 %v82, %v216
  %v218 = vpop.f32.mrb[0].mxu0
  %219 = vmatprep.mubr.bf16.mxu0 0
  %220 = vmatmul.mubr.bf16.gmra.mrb[0].mxu0 %v110
  %v221 = vpop.f32.mrb[0].mxu0
  %v222 = vadd.f32 %v82, %v221
  %v223 = vpop.f32.mrb[0].mxu0
  %v224 = vpop.f32.mrb[0].mxu0
  %v225 = vadd.f32 %v82, %v224
  %v226 = vpop.f32.mrb[0].mxu0
  %227 = vmatprep.mubr.bf16.mxu0 0
  %228 = vmatmul.mubr.bf16.gmra.mrb[0].mxu0 %v113
  %v229 = vpop.f32.mrb[0].mxu0
  %v230 = vadd.f32 %v82, %v229
  %v231 = vpop.f32.mrb[0].mxu0
  %v232 = vpop.f32.mrb[0].mxu0
  %v233 = vadd.f32 %v82, %v232
  %v234 = vpop.f32.mrb[0].mxu0
  %235 = vmatprep.mubr.bf16.mxu0 0
  %236 = vmatmul.mubr.bf16.gmra.mrb[0].mxu0 %v116
  %v237 = vpop.f32.mrb[0].mxu0
  %v238 = vadd.f32 %v82, %v237
  %v239 = vpop.f32.mrb[0].mxu0
  %v240 = vpop.f32.mrb[0].mxu0
  %v241 = vadd.f32 %v82, %v240
  %v242 = vpop.f32.mrb[0].mxu0
  %243 = vmatprep.mubr.bf16.mxu0 0
  %244 = vmatmul.mubr.bf16.gmra.mrb[0].mxu0 %v119
  %v245 = vpop.f32.mrb[0].mxu0
  %v246 = vadd.f32 %v82, %v245
  %v247 = vpop.f32.mrb[0].mxu0
  %v248 = vpop.f32.mrb[0].mxu0
  %v249 = vadd.f32 %v82, %v248
  %v250 = vpop.f32.mrb[0].mxu0
  %251 = vmatprep.mubr.bf16.mxu0 0
  %252 = vmatmul.mubr.bf16.gmra.mrb[0].mxu0 %v122
  %v253 = vpop.f32.mrb[0].mxu0
  %v254 = vadd.f32 %v82, %v253
  %v255 = vpop.f32.mrb[0].mxu0
  %v256 = vpop.f32.mrb[0].mxu0
  %v257 = vadd.f32 %v82, %v256
  %v258 = vpop.f32.mrb[0].mxu0
  %259 = vmatprep.mubr.bf16.mxu0 0
  %260 = vmatmul.mubr.bf16.gmra.mrb[0].mxu0 %v125
  %v261 = vpop.f32.mrb[0].mxu0
  %v262 = vadd.f32 %v82, %v261
  %v263 = vpop.f32.mrb[0].mxu0
  %v264 = vpop.f32.mrb[0].mxu0
  %v265 = vadd.f32 %v82, %v264
  %v266 = vpop.f32.mrb[0].mxu0
  %267 = vmatprep.mubr.bf16.mxu0 0
  %268 = vmatmul.mubr.bf16.gmra.mrb[0].mxu0 %v128
  %v269 = vpop.f32.mrb[0].mxu0
  %v270 = vadd.f32 %v82, %v269
  %v271 = vpop.f32.mrb[0].mxu0
  %v272 = vpop.f32.mrb[0].mxu0
  %v273 = vadd.f32 %v82, %v272
  %v274 = vpop.f32.mrb[0].mxu0
  %275 = vmatprep.mubr.bf16.mxu0 0
  %276 = vmatmul.mubr.bf16.gmra.mrb[0].mxu0 %v131
  %v277 = vpop.f32.mrb[0].mxu0
  %v278 = vadd.f32 %v82, %v277
  %v279 = vpop.f32.mrb[0].mxu0
  %v280 = vpop.f32.mrb[0].mxu0
  %v281 = vadd.f32 %v82, %v280
  %v282 = vpop.f32.mrb[0].mxu0
  %283 = vmatprep.mubr.bf16.mxu0 0
  %284 = vmatmul.mubr.bf16.gmra.mrb[0].mxu0 %v134
  %v285 = vpop.f32.mrb[0].mxu0
  %v286 = vadd.f32 %v82, %v285
  %v287 = vpop.f32.mrb[0].mxu0
  %v288 = vpop.f32.mrb[0].mxu0
  %v289 = vadd.f32 %v82, %v288
  %v290 = vpop.f32.mrb[0].mxu0
  %291 = vmatprep.mubr.bf16.mxu0 0
  %292 = vmatmul.mubr.bf16.gmra.mrb[0].mxu0 %v137
  %v293 = vpop.f32.mrb[0].mxu0
  %v294 = vadd.f32 %v82, %v293
  %v295 = vpop.f32.mrb[0].mxu0
  %v296 = vpop.f32.mrb[0].mxu0
  %v297 = vadd.f32 %v82, %v296
  %v298 = vpop.f32.mrb[0].mxu0
  %299 = vdwg.mxu0
  %v300 = vmax.f32 %v174, 0.0
  %v301 = vmax.f32 %v177, 0.0
  %v302 = vmax.f32 %v182, 0.0
  %v303 = vmax.f32 %v185, 0.0
  %v304 = vmax.f32 %v190, 0.0
  %v305 = vmax.f32 %v193, 0.0
  %v306 = vmax.f32 %v198, 0.0
  %v307 = vmax.f32 %v201, 0.0
  %v308 = vmax.f32 %v206, 0.0
  %v309 = vmax.f32 %v209, 0.0
  %v310 = vmax.f32 %v214, 0.0
  %v311 = vmax.f32 %v217, 0.0
  %v312 = vmax.f32 %v222, 0.0
  %v313 = vmax.f32 %v225, 0.0
  %v314 = vmax.f32 %v230, 0.0
  %v315 = vmax.f32 %v233, 0.0
  %v316 = vmax.f32 %v238, 0.0
  %v317 = vmax.f32 %v241, 0.0
  %v318 = vmax.f32 %v246, 0.0
  %v319 = vmax.f32 %v249, 0.0
  %v320 = vmax.f32 %v254, 0.0
  %v321 = vmax.f32 %v257, 0.0
  %v322 = vmax.f32 %v262, 0.0
  %v323 = vmax.f32 %v265, 0.0
  %v324 = vmax.f32 %v270, 0.0
  %v325 = vmax.f32 %v273, 0.0
  %v326 = vmax.f32 %v278, 0.0
  %v327 = vmax.f32 %v281, 0.0
  %v328 = vmax.f32 %v286, 0.0
  %v329 = vmax.f32 %v289, 0.0
  %v330 = vmax.f32 %v294, 0.0
  %v331 = vmax.f32 %v297, 0.0
  %v332 = vpack.c.bf16 %v301, %v300
  %v333 = vpack.c.bf16 %v303, %v302
  %v334 = vpack.c.bf16 %v305, %v304
  %v335 = vpack.c.bf16 %v307, %v306
  %v336 = vpack.c.bf16 %v309, %v308
  %v337 = vpack.c.bf16 %v311, %v310
  %v338 = vpack.c.bf16 %v313, %v312
  %v339 = vpack.c.bf16 %v315, %v314
  %v340 = vpack.c.bf16 %v317, %v316
  %v341 = vpack.c.bf16 %v319, %v318
  %v342 = vpack.c.bf16 %v321, %v320
  %v343 = vpack.c.bf16 %v323, %v322
  %v344 = vpack.c.bf16 %v325, %v324
  %v345 = vpack.c.bf16 %v327, %v326
  %v346 = vpack.c.bf16 %v329, %v328
  %v347 = vpack.c.bf16 %v331, %v330
  %v348 = vld [vmem:[%s3] sm:$0xf]
  %v349 = vld [vmem:[%s3 + $0x4] sm:$0xf]
  %v350 = vld [vmem:[%s3 + $0x8] sm:$0xf]
  %v351 = vld [vmem:[%s3 + $0xc] sm:$0xf]
  %v352 = vld [vmem:[%s4] sm:$0x1]
  %v354 = vlaneseq
  %v355 = vshrl.u32 %v354, 7
  %v356 = vsub.s32 0, %v355
  %v357 = vrot.slane %v352, %v356
  %v363 = vunpack.c.l.b16 %v348
  %v364 = vunpack.c.l.b16 %v349
  %v365 = vunpack.c.l.b16 %v350
  %v366 = vunpack.c.l.b16 %v351
  %v367 = vpack.c.b16 %v364, %v363
  %v368 = vpack.c.b16 %v366, %v365
  %vm371 = vcmask 261120
  %v373 = vsel %vm371, %v332, 0
  %v376 = vsel %vm371, %v333, 0
  %v379 = vsel %vm371, %v334, 0
  %v382 = vsel %vm371, %v335, 0
  %v385 = vsel %vm371, %v336, 0
  %v388 = vsel %vm371, %v337, 0
  %v391 = vsel %vm371, %v338, 0
  %v394 = vsel %vm371, %v339, 0
  %v397 = vsel %vm371, %v340, 0
  %v400 = vsel %vm371, %v341, 0
  %v403 = vsel %vm371, %v342, 0
  %v406 = vsel %vm371, %v343, 0
  %v409 = vsel %vm371, %v344, 0
  %v412 = vsel %vm371, %v345, 0
  %v415 = vsel %vm371, %v346, 0
  %v418 = vsel %vm371, %v347, 0
  %420 = vmatprep.subr.bf16.mxu0 0
  %421 = vmatpush1.bf16.msra.mxu0 %v367
  %422 = vmatprep.subr.bf16.mxu0 0
  %423 = vmatpush1.bf16.msra.mxu0 %v368
  %424 = vmatprep.subr.bf16.mxu0 0
  %425 = vmatpush1.bf16.msra.mxu0 0
  %426 = vmatprep.subr.bf16.mxu0 0
  %427 = vmatpush1.bf16.msra.mxu0 0
  %428 = vmatprep.subr.bf16.mxu0 0
  %429 = vmatpush1.bf16.msra.mxu0 0
  %430 = vmatprep.subr.bf16.mxu0 0
  %431 = vmatpush1.bf16.msra.mxu0 0
  %432 = vmatprep.subr.bf16.mxu0 0
  %433 = vmatpush1.bf16.msra.mxu0 0
  %434 = vmatprep.subr.bf16.mxu0 0
  %435 = vmatpush1.bf16.msra.mxu0 0
  %436 = vmatprep.subr.bf16.mxu0 0
  %437 = vmatpush1.bf16.msra.mxu0 0
  %438 = vmatprep.subr.bf16.mxu0 0
  %439 = vmatpush1.bf16.msra.mxu0 0
  %440 = vmatprep.subr.bf16.mxu0 0
  %441 = vmatpush1.bf16.msra.mxu0 0
  %442 = vmatprep.subr.bf16.mxu0 0
  %443 = vmatpush1.bf16.msra.mxu0 0
  %444 = vmatprep.subr.bf16.mxu0 0
  %445 = vmatpush1.bf16.msra.mxu0 0
  %446 = vmatprep.subr.bf16.mxu0 0
  %447 = vmatpush1.bf16.msra.mxu0 0
  %448 = vmatprep.subr.bf16.mxu0 0
  %449 = vmatpush1.bf16.msra.mxu0 0
  %450 = vmatprep.subr.bf16.mxu0 0
  %451 = vmatpush1.bf16.msra.mxu0 0
  %452 = vmatprep.mubr.bf16.mxu0 0
  %453 = vmatmul.mubr.bf16.gmra.mrb[0].mxu0 %v373
  %v454 = vpop.f32.mrb[0].mxu0
  %v455 = vadd.f32 %v357, %v454
  %v456 = vpop.f32.mrb[0].mxu0
  %v457 = vpop.f32.mrb[0].mxu0
  %v458 = vadd.f32 %v357, %v457
  %v459 = vpop.f32.mrb[0].mxu0
  %460 = vmatprep.mubr.bf16.mxu0 0
  %461 = vmatmul.mubr.bf16.gmra.mrb[0].mxu0 %v376
  %v462 = vpop.f32.mrb[0].mxu0
  %v463 = vadd.f32 %v357, %v462
  %v464 = vpop.f32.mrb[0].mxu0
  %v465 = vpop.f32.mrb[0].mxu0
  %v466 = vadd.f32 %v357, %v465
  %v467 = vpop.f32.mrb[0].mxu0
  %468 = vmatprep.mubr.bf16.mxu0 0
  %469 = vmatmul.mubr.bf16.gmra.mrb[0].mxu0 %v379
  %v470 = vpop.f32.mrb[0].mxu0
  %v471 = vadd.f32 %v357, %v470
  %v472 = vpop.f32.mrb[0].mxu0
  %v473 = vpop.f32.mrb[0].mxu0
  %v474 = vadd.f32 %v357, %v473
  %v475 = vpop.f32.mrb[0].mxu0
  %476 = vmatprep.mubr.bf16.mxu0 0
  %477 = vmatmul.mubr.bf16.gmra.mrb[0].mxu0 %v382
  %v478 = vpop.f32.mrb[0].mxu0
  %v479 = vadd.f32 %v357, %v478
  %v480 = vpop.f32.mrb[0].mxu0
  %v481 = vpop.f32.mrb[0].mxu0
  %v482 = vadd.f32 %v357, %v481
  %v483 = vpop.f32.mrb[0].mxu0
  %484 = vmatprep.mubr.bf16.mxu0 0
  %485 = vmatmul.mubr.bf16.gmra.mrb[0].mxu0 %v385
  %v486 = vpop.f32.mrb[0].mxu0
  %v487 = vadd.f32 %v357, %v486
  %v488 = vpop.f32.mrb[0].mxu0
  %v489 = vpop.f32.mrb[0].mxu0
  %v490 = vadd.f32 %v357, %v489
  %v491 = vpop.f32.mrb[0].mxu0
  %492 = vmatprep.mubr.bf16.mxu0 0
  %493 = vmatmul.mubr.bf16.gmra.mrb[0].mxu0 %v388
  %v494 = vpop.f32.mrb[0].mxu0
  %v495 = vadd.f32 %v357, %v494
  %v496 = vpop.f32.mrb[0].mxu0
  %v497 = vpop.f32.mrb[0].mxu0
  %v498 = vadd.f32 %v357, %v497
  %v499 = vpop.f32.mrb[0].mxu0
  %500 = vmatprep.mubr.bf16.mxu0 0
  %501 = vmatmul.mubr.bf16.gmra.mrb[0].mxu0 %v391
  %v502 = vpop.f32.mrb[0].mxu0
  %v503 = vadd.f32 %v357, %v502
  %v504 = vpop.f32.mrb[0].mxu0
  %v505 = vpop.f32.mrb[0].mxu0
  %v506 = vadd.f32 %v357, %v505
  %v507 = vpop.f32.mrb[0].mxu0
  %508 = vmatprep.mubr.bf16.mxu0 0
  %509 = vmatmul.mubr.bf16.gmra.mrb[0].mxu0 %v394
  %v510 = vpop.f32.mrb[0].mxu0
  %v511 = vadd.f32 %v357, %v510
  %v512 = vpop.f32.mrb[0].mxu0
  %v513 = vpop.f32.mrb[0].mxu0
  %v514 = vadd.f32 %v357, %v513
  %v515 = vpop.f32.mrb[0].mxu0
  %516 = vmatprep.mubr.bf16.mxu0 0
  %517 = vmatmul.mubr.bf16.gmra.mrb[0].mxu0 %v397
  %v518 = vpop.f32.mrb[0].mxu0
  %v519 = vadd.f32 %v357, %v518
  %v520 = vpop.f32.mrb[0].mxu0
  %v521 = vpop.f32.mrb[0].mxu0
  %v522 = vadd.f32 %v357, %v521
  %v523 = vpop.f32.mrb[0].mxu0
  %524 = vmatprep.mubr.bf16.mxu0 0
  %525 = vmatmul.mubr.bf16.gmra.mrb[0].mxu0 %v400
  %v526 = vpop.f32.mrb[0].mxu0
  %v527 = vadd.f32 %v357, %v526
  %v528 = vpop.f32.mrb[0].mxu0
  %v529 = vpop.f32.mrb[0].mxu0
  %v530 = vadd.f32 %v357, %v529
  %v531 = vpop.f32.mrb[0].mxu0
  %532 = vmatprep.mubr.bf16.mxu0 0
  %533 = vmatmul.mubr.bf16.gmra.mrb[0].mxu0 %v403
  %v534 = vpop.f32.mrb[0].mxu0
  %v535 = vadd.f32 %v357, %v534
  %v536 = vpop.f32.mrb[0].mxu0
  %v537 = vpop.f32.mrb[0].mxu0
  %v538 = vadd.f32 %v357, %v537
  %v539 = vpop.f32.mrb[0].mxu0
  %540 = vmatprep.mubr.bf16.mxu0 0
  %541 = vmatmul.mubr.bf16.gmra.mrb[0].mxu0 %v406
  %v542 = vpop.f32.mrb[0].mxu0
  %v543 = vadd.f32 %v357, %v542
  %v544 = vpop.f32.mrb[0].mxu0
  %v545 = vpop.f32.mrb[0].mxu0
  %v546 = vadd.f32 %v357, %v545
  %v547 = vpop.f32.mrb[0].mxu0
  %548 = vmatprep.mubr.bf16.mxu0 0
  %549 = vmatmul.mubr.bf16.gmra.mrb[0].mxu0 %v409
  %v550 = vpop.f32.mrb[0].mxu0
  %v551 = vadd.f32 %v357, %v550
  %v552 = vpop.f32.mrb[0].mxu0
  %v553 = vpop.f32.mrb[0].mxu0
  %v554 = vadd.f32 %v357, %v553
  %v555 = vpop.f32.mrb[0].mxu0
  %556 = vmatprep.mubr.bf16.mxu0 0
  %557 = vmatmul.mubr.bf16.gmra.mrb[0].mxu0 %v412
  %v558 = vpop.f32.mrb[0].mxu0
  %v559 = vadd.f32 %v357, %v558
  %v560 = vpop.f32.mrb[0].mxu0
  %v561 = vpop.f32.mrb[0].mxu0
  %v562 = vadd.f32 %v357, %v561
  %v563 = vpop.f32.mrb[0].mxu0
  %564 = vmatprep.mubr.bf16.mxu0 0
  %565 = vmatmul.mubr.bf16.gmra.mrb[0].mxu0 %v415
  %v566 = vpop.f32.mrb[0].mxu0
  %v567 = vadd.f32 %v357, %v566
  %v568 = vpop.f32.mrb[0].mxu0
  %v569 = vpop.f32.mrb[0].mxu0
  %v570 = vadd.f32 %v357, %v569
  %v571 = vpop.f32.mrb[0].mxu0
  %572 = vmatprep.mubr.bf16.mxu0 0
  %573 = vmatmul.mubr.bf16.gmra.mrb[0].mxu0 %v418
  %v574 = vpop.f32.mrb[0].mxu0
  %v575 = vadd.f32 %v357, %v574
  %v576 = vpop.f32.mrb[0].mxu0
  %v577 = vpop.f32.mrb[0].mxu0
  %v578 = vadd.f32 %v357, %v577
  %v579 = vpop.f32.mrb[0].mxu0
  %580 = vdwg.mxu0
  %v581 = vmax.f32 %v455, 0.0
  %v582 = vmax.f32 %v458, 0.0
  %v583 = vmax.f32 %v463, 0.0
  %v584 = vmax.f32 %v466, 0.0
  %v585 = vmax.f32 %v471, 0.0
  %v586 = vmax.f32 %v474, 0.0
  %v587 = vmax.f32 %v479, 0.0
  %v588 = vmax.f32 %v482, 0.0
  %v589 = vmax.f32 %v487, 0.0
  %v590 = vmax.f32 %v490, 0.0
  %v591 = vmax.f32 %v495, 0.0
  %v592 = vmax.f32 %v498, 0.0
  %v593 = vmax.f32 %v503, 0.0
  %v594 = vmax.f32 %v506, 0.0
  %v595 = vmax.f32 %v511, 0.0
  %v596 = vmax.f32 %v514, 0.0
  %v597 = vmax.f32 %v519, 0.0
  %v598 = vmax.f32 %v522, 0.0
  %v599 = vmax.f32 %v527, 0.0
  %v600 = vmax.f32 %v530, 0.0
  %v601 = vmax.f32 %v535, 0.0
  %v602 = vmax.f32 %v538, 0.0
  %v603 = vmax.f32 %v543, 0.0
  %v604 = vmax.f32 %v546, 0.0
  %v605 = vmax.f32 %v551, 0.0
  %v606 = vmax.f32 %v554, 0.0
  %v607 = vmax.f32 %v559, 0.0
  %v608 = vmax.f32 %v562, 0.0
  %v609 = vmax.f32 %v567, 0.0
  %v610 = vmax.f32 %v570, 0.0
  %v611 = vmax.f32 %v575, 0.0
  %v612 = vmax.f32 %v578, 0.0
  %v613 = vpack.c.bf16 %v582, %v581
  %v614 = vpack.c.bf16 %v584, %v583
  %v615 = vpack.c.bf16 %v586, %v585
  %v616 = vpack.c.bf16 %v588, %v587
  %v617 = vpack.c.bf16 %v590, %v589
  %v618 = vpack.c.bf16 %v592, %v591
  %v619 = vpack.c.bf16 %v594, %v593
  %v620 = vpack.c.bf16 %v596, %v595
  %v621 = vpack.c.bf16 %v598, %v597
  %v622 = vpack.c.bf16 %v600, %v599
  %v623 = vpack.c.bf16 %v602, %v601
  %v624 = vpack.c.bf16 %v604, %v603
  %v625 = vpack.c.bf16 %v606, %v605
  %v626 = vpack.c.bf16 %v608, %v607
  %v627 = vpack.c.bf16 %v610, %v609
  %v628 = vpack.c.bf16 %v612, %v611
  %v629 = vld [vmem:[%s5] sm:$0xf]
  %v630 = vld [vmem:[%s5 + $0x4] sm:$0xf]
  %v631 = vld [vmem:[%s5 + $0x8] sm:$0xf]
  %v632 = vld [vmem:[%s5 + $0xc] sm:$0xf]
  %v633 = vld [vmem:[%s6] sm:$0x1]
  %v635 = vlaneseq
  %v636 = vshrl.u32 %v635, 7
  %v637 = vsub.s32 0, %v636
  %v638 = vrot.slane %v633, %v637
  %v644 = vunpack.c.l.b16 %v629
  %v645 = vunpack.c.l.b16 %v630
  %v646 = vunpack.c.l.b16 %v631
  %v647 = vunpack.c.l.b16 %v632
  %v648 = vpack.c.b16 %v645, %v644
  %v649 = vpack.c.b16 %v647, %v646
  %v653 = vsel %vm371, %v613, 0
  %v656 = vsel %vm371, %v614, 0
  %v659 = vsel %vm371, %v615, 0
  %v662 = vsel %vm371, %v616, 0
  %v665 = vsel %vm371, %v617, 0
  %v668 = vsel %vm371, %v618, 0
  %v671 = vsel %vm371, %v619, 0
  %v674 = vsel %vm371, %v620, 0
  %v677 = vsel %vm371, %v621, 0
  %v680 = vsel %vm371, %v622, 0
  %v683 = vsel %vm371, %v623, 0
  %v686 = vsel %vm371, %v624, 0
  %v689 = vsel %vm371, %v625, 0
  %v692 = vsel %vm371, %v626, 0
  %v695 = vsel %vm371, %v627, 0
  %v698 = vsel %vm371, %v628, 0
  %700 = vmatprep.subr.bf16.mxu0 0
  %701 = vmatpush1.bf16.msra.mxu0 %v648
  %702 = vmatprep.subr.bf16.mxu0 0
  %703 = vmatpush1.bf16.msra.mxu0 %v649
  %704 = vmatprep.subr.bf16.mxu0 0
  %705 = vmatpush1.bf16.msra.mxu0 0
  %706 = vmatprep.subr.bf16.mxu0 0
  %707 = vmatpush1.bf16.msra.mxu0 0
  %708 = vmatprep.subr.bf16.mxu0 0
  %709 = vmatpush1.bf16.msra.mxu0 0
  %710 = vmatprep.subr.bf16.mxu0 0
  %711 = vmatpush1.bf16.msra.mxu0 0
  %712 = vmatprep.subr.bf16.mxu0 0
  %713 = vmatpush1.bf16.msra.mxu0 0
  %714 = vmatprep.subr.bf16.mxu0 0
  %715 = vmatpush1.bf16.msra.mxu0 0
  %716 = vmatprep.subr.bf16.mxu0 0
  %717 = vmatpush1.bf16.msra.mxu0 0
  %718 = vmatprep.subr.bf16.mxu0 0
  %719 = vmatpush1.bf16.msra.mxu0 0
  %720 = vmatprep.subr.bf16.mxu0 0
  %721 = vmatpush1.bf16.msra.mxu0 0
  %722 = vmatprep.subr.bf16.mxu0 0
  %723 = vmatpush1.bf16.msra.mxu0 0
  %724 = vmatprep.subr.bf16.mxu0 0
  %725 = vmatpush1.bf16.msra.mxu0 0
  %726 = vmatprep.subr.bf16.mxu0 0
  %727 = vmatpush1.bf16.msra.mxu0 0
  %728 = vmatprep.subr.bf16.mxu0 0
  %729 = vmatpush1.bf16.msra.mxu0 0
  %730 = vmatprep.subr.bf16.mxu0 0
  %731 = vmatpush1.bf16.msra.mxu0 0
  %732 = vmatprep.mubr.bf16.mxu0 0
  %733 = vmatmul.mubr.bf16.gmra.mrb[0].mxu0 %v653
  %v734 = vpop.f32.mrb[0].mxu0
  %v735 = vadd.f32 %v638, %v734
  %v736 = vpop.f32.mrb[0].mxu0
  %v737 = vpop.f32.mrb[0].mxu0
  %v738 = vadd.f32 %v638, %v737
  %v739 = vpop.f32.mrb[0].mxu0
  %740 = vmatprep.mubr.bf16.mxu0 0
  %741 = vmatmul.mubr.bf16.gmra.mrb[0].mxu0 %v656
  %v742 = vpop.f32.mrb[0].mxu0
  %v743 = vadd.f32 %v638, %v742
  %v744 = vpop.f32.mrb[0].mxu0
  %v745 = vpop.f32.mrb[0].mxu0
  %v746 = vadd.f32 %v638, %v745
  %v747 = vpop.f32.mrb[0].mxu0
  %748 = vmatprep.mubr.bf16.mxu0 0
  %749 = vmatmul.mubr.bf16.gmra.mrb[0].mxu0 %v659
  %v750 = vpop.f32.mrb[0].mxu0
  %v751 = vadd.f32 %v638, %v750
  %v752 = vpop.f32.mrb[0].mxu0
  %v753 = vpop.f32.mrb[0].mxu0
  %v754 = vadd.f32 %v638, %v753
  %v755 = vpop.f32.mrb[0].mxu0
  %756 = vmatprep.mubr.bf16.mxu0 0
  %757 = vmatmul.mubr.bf16.gmra.mrb[0].mxu0 %v662
  %v758 = vpop.f32.mrb[0].mxu0
  %v759 = vadd.f32 %v638, %v758
  %v760 = vpop.f32.mrb[0].mxu0
  %v761 = vpop.f32.mrb[0].mxu0
  %v762 = vadd.f32 %v638, %v761
  %v763 = vpop.f32.mrb[0].mxu0
  %764 = vmatprep.mubr.bf16.mxu0 0
  %765 = vmatmul.mubr.bf16.gmra.mrb[0].mxu0 %v665
  %v766 = vpop.f32.mrb[0].mxu0
  %v767 = vadd.f32 %v638, %v766
  %v768 = vpop.f32.mrb[0].mxu0
  %v769 = vpop.f32.mrb[0].mxu0
  %v770 = vadd.f32 %v638, %v769
  %v771 = vpop.f32.mrb[0].mxu0
  %772 = vmatprep.mubr.bf16.mxu0 0
  %773 = vmatmul.mubr.bf16.gmra.mrb[0].mxu0 %v668
  %v774 = vpop.f32.mrb[0].mxu0
  %v775 = vadd.f32 %v638, %v774
  %v776 = vpop.f32.mrb[0].mxu0
  %v777 = vpop.f32.mrb[0].mxu0
  %v778 = vadd.f32 %v638, %v777
  %v779 = vpop.f32.mrb[0].mxu0
  %780 = vmatprep.mubr.bf16.mxu0 0
  %781 = vmatmul.mubr.bf16.gmra.mrb[0].mxu0 %v671
  %v782 = vpop.f32.mrb[0].mxu0
  %v783 = vadd.f32 %v638, %v782
  %v784 = vpop.f32.mrb[0].mxu0
  %v785 = vpop.f32.mrb[0].mxu0
  %v786 = vadd.f32 %v638, %v785
  %v787 = vpop.f32.mrb[0].mxu0
  %788 = vmatprep.mubr.bf16.mxu0 0
  %789 = vmatmul.mubr.bf16.gmra.mrb[0].mxu0 %v674
  %v790 = vpop.f32.mrb[0].mxu0
  %v791 = vadd.f32 %v638, %v790
  %v792 = vpop.f32.mrb[0].mxu0
  %v793 = vpop.f32.mrb[0].mxu0
  %v794 = vadd.f32 %v638, %v793
  %v795 = vpop.f32.mrb[0].mxu0
  %796 = vmatprep.mubr.bf16.mxu0 0
  %797 = vmatmul.mubr.bf16.gmra.mrb[0].mxu0 %v677
  %v798 = vpop.f32.mrb[0].mxu0
  %v799 = vadd.f32 %v638, %v798
  %v800 = vpop.f32.mrb[0].mxu0
  %v801 = vpop.f32.mrb[0].mxu0
  %v802 = vadd.f32 %v638, %v801
  %v803 = vpop.f32.mrb[0].mxu0
  %804 = vmatprep.mubr.bf16.mxu0 0
  %805 = vmatmul.mubr.bf16.gmra.mrb[0].mxu0 %v680
  %v806 = vpop.f32.mrb[0].mxu0
  %v807 = vadd.f32 %v638, %v806
  %v808 = vpop.f32.mrb[0].mxu0
  %v809 = vpop.f32.mrb[0].mxu0
  %v810 = vadd.f32 %v638, %v809
  %v811 = vpop.f32.mrb[0].mxu0
  %812 = vmatprep.mubr.bf16.mxu0 0
  %813 = vmatmul.mubr.bf16.gmra.mrb[0].mxu0 %v683
  %v814 = vpop.f32.mrb[0].mxu0
  %v815 = vadd.f32 %v638, %v814
  %v816 = vpop.f32.mrb[0].mxu0
  %v817 = vpop.f32.mrb[0].mxu0
  %v818 = vadd.f32 %v638, %v817
  %v819 = vpop.f32.mrb[0].mxu0
  %820 = vmatprep.mubr.bf16.mxu0 0
  %821 = vmatmul.mubr.bf16.gmra.mrb[0].mxu0 %v686
  %v822 = vpop.f32.mrb[0].mxu0
  %v823 = vadd.f32 %v638, %v822
  %v824 = vpop.f32.mrb[0].mxu0
  %v825 = vpop.f32.mrb[0].mxu0
  %v826 = vadd.f32 %v638, %v825
  %v827 = vpop.f32.mrb[0].mxu0
  %828 = vmatprep.mubr.bf16.mxu0 0
  %829 = vmatmul.mubr.bf16.gmra.mrb[0].mxu0 %v689
  %v830 = vpop.f32.mrb[0].mxu0
  %v831 = vadd.f32 %v638, %v830
  %v832 = vpop.f32.mrb[0].mxu0
  %v833 = vpop.f32.mrb[0].mxu0
  %v834 = vadd.f32 %v638, %v833
  %v835 = vpop.f32.mrb[0].mxu0
  %836 = vmatprep.mubr.bf16.mxu0 0
  %837 = vmatmul.mubr.bf16.gmra.mrb[0].mxu0 %v692
  %v838 = vpop.f32.mrb[0].mxu0
  %v839 = vadd.f32 %v638, %v838
  %v840 = vpop.f32.mrb[0].mxu0
  %v841 = vpop.f32.mrb[0].mxu0
  %v842 = vadd.f32 %v638, %v841
  %v843 = vpop.f32.mrb[0].mxu0
  %844 = vmatprep.mubr.bf16.mxu0 0
  %845 = vmatmul.mubr.bf16.gmra.mrb[0].mxu0 %v695
  %v846 = vpop.f32.mrb[0].mxu0
  %v847 = vadd.f32 %v638, %v846
  %v848 = vpop.f32.mrb[0].mxu0
  %v849 = vpop.f32.mrb[0].mxu0
  %v850 = vadd.f32 %v638, %v849
  %v851 = vpop.f32.mrb[0].mxu0
  %852 = vmatprep.mubr.bf16.mxu0 0
  %853 = vmatmul.mubr.bf16.gmra.mrb[0].mxu0 %v698
  %v854 = vpop.f32.mrb[0].mxu0
  %v855 = vadd.f32 %v638, %v854
  %v856 = vpop.f32.mrb[0].mxu0
  %v857 = vpop.f32.mrb[0].mxu0
  %v858 = vadd.f32 %v638, %v857
  %v859 = vpop.f32.mrb[0].mxu0
  %860 = vdwg.mxu0
  %vm861 = vcmask 64512
  %v862 = vsel %vm861, %v735, -inf
  %863 = vmax.xlane.f32.xlu0 %v862
  %v864 = vpop.xlane.xlu0 %863
  %v865 = vsel %vm861, %v738, -inf
  %866 = vmax.xlane.f32.xlu0 %v865
  %v867 = vpop.xlane.xlu0 %866
  %v868 = vsel %vm861, %v743, -inf
  %869 = vmax.xlane.f32.xlu0 %v868
  %v870 = vpop.xlane.xlu0 %869
  %v871 = vsel %vm861, %v746, -inf
  %872 = vmax.xlane.f32.xlu0 %v871
  %v873 = vpop.xlane.xlu0 %872
  %v874 = vsel %vm861, %v751, -inf
  %875 = vmax.xlane.f32.xlu0 %v874
  %v876 = vpop.xlane.xlu0 %875
  %v877 = vsel %vm861, %v754, -inf
  %878 = vmax.xlane.f32.xlu0 %v877
  %v879 = vpop.xlane.xlu0 %878
  %v880 = vsel %vm861, %v759, -inf
  %881 = vmax.xlane.f32.xlu0 %v880
  %v882 = vpop.xlane.xlu0 %881
  %v883 = vsel %vm861, %v762, -inf
  %884 = vmax.xlane.f32.xlu0 %v883
  %v885 = vpop.xlane.xlu0 %884
  %v886 = vsel %vm861, %v767, -inf
  %887 = vmax.xlane.f32.xlu0 %v886
  %v888 = vpop.xlane.xlu0 %887
  %v889 = vsel %vm861, %v770, -inf
  %890 = vmax.xlane.f32.xlu0 %v889
  %v891 = vpop.xlane.xlu0 %890
  %v892 = vsel %vm861, %v775, -inf
  %893 = vmax.xlane.f32.xlu0 %v892
  %v894 = vpop.xlane.xlu0 %893
  %v895 = vsel %vm861, %v778, -inf
  %896 = vmax.xlane.f32.xlu0 %v895
  %v897 = vpop.xlane.xlu0 %896
  %v898 = vsel %vm861, %v783, -inf
  %899 = vmax.xlane.f32.xlu0 %v898
  %v900 = vpop.xlane.xlu0 %899
  %v901 = vsel %vm861, %v786, -inf
  %902 = vmax.xlane.f32.xlu0 %v901
  %v903 = vpop.xlane.xlu0 %902
  %v904 = vsel %vm861, %v791, -inf
  %905 = vmax.xlane.f32.xlu0 %v904
  %v906 = vpop.xlane.xlu0 %905
  %v907 = vsel %vm861, %v794, -inf
  %908 = vmax.xlane.f32.xlu0 %v907
  %v909 = vpop.xlane.xlu0 %908
  %v910 = vsel %vm861, %v799, -inf
  %911 = vmax.xlane.f32.xlu0 %v910
  %v912 = vpop.xlane.xlu0 %911
  %v913 = vsel %vm861, %v802, -inf
  %914 = vmax.xlane.f32.xlu0 %v913
  %v915 = vpop.xlane.xlu0 %914
  %v916 = vsel %vm861, %v807, -inf
  %917 = vmax.xlane.f32.xlu0 %v916
  %v918 = vpop.xlane.xlu0 %917
  %v919 = vsel %vm861, %v810, -inf
  %920 = vmax.xlane.f32.xlu0 %v919
  %v921 = vpop.xlane.xlu0 %920
  %v922 = vsel %vm861, %v815, -inf
  %923 = vmax.xlane.f32.xlu0 %v922
  %v924 = vpop.xlane.xlu0 %923
  %v925 = vsel %vm861, %v818, -inf
  %926 = vmax.xlane.f32.xlu0 %v925
  %v927 = vpop.xlane.xlu0 %926
  %v928 = vsel %vm861, %v823, -inf
  %929 = vmax.xlane.f32.xlu0 %v928
  %v930 = vpop.xlane.xlu0 %929
  %v931 = vsel %vm861, %v826, -inf
  %932 = vmax.xlane.f32.xlu0 %v931
  %v933 = vpop.xlane.xlu0 %932
  %v934 = vsel %vm861, %v831, -inf
  %935 = vmax.xlane.f32.xlu0 %v934
  %v936 = vpop.xlane.xlu0 %935
  %v937 = vsel %vm861, %v834, -inf
  %938 = vmax.xlane.f32.xlu0 %v937
  %v939 = vpop.xlane.xlu0 %938
  %v940 = vsel %vm861, %v839, -inf
  %941 = vmax.xlane.f32.xlu0 %v940
  %v942 = vpop.xlane.xlu0 %941
  %v943 = vsel %vm861, %v842, -inf
  %944 = vmax.xlane.f32.xlu0 %v943
  %v945 = vpop.xlane.xlu0 %944
  %v946 = vsel %vm861, %v847, -inf
  %947 = vmax.xlane.f32.xlu0 %v946
  %v948 = vpop.xlane.xlu0 %947
  %v949 = vsel %vm861, %v850, -inf
  %950 = vmax.xlane.f32.xlu0 %v949
  %v951 = vpop.xlane.xlu0 %950
  %v952 = vsel %vm861, %v855, -inf
  %953 = vmax.xlane.f32.xlu0 %v952
  %v954 = vpop.xlane.xlu0 %953
  %v955 = vsel %vm861, %v858, -inf
  %956 = vmax.xlane.f32.xlu0 %v955
  %v957 = vpop.xlane.xlu0 %956
  %v958 = vsub.f32 %v735, %v864
  %v959 = vsub.f32 %v738, %v867
  %v960 = vsub.f32 %v743, %v870
  %v961 = vsub.f32 %v746, %v873
  %v962 = vsub.f32 %v751, %v876
  %v963 = vsub.f32 %v754, %v879
  %v964 = vsub.f32 %v759, %v882
  %v965 = vsub.f32 %v762, %v885
  %v966 = vsub.f32 %v767, %v888
  %v967 = vsub.f32 %v770, %v891
  %v968 = vsub.f32 %v775, %v894
  %v969 = vsub.f32 %v778, %v897
  %v970 = vsub.f32 %v783, %v900
  %v971 = vsub.f32 %v786, %v903
  %v972 = vsub.f32 %v791, %v906
  %v973 = vsub.f32 %v794, %v909
  %v974 = vsub.f32 %v799, %v912
  %v975 = vsub.f32 %v802, %v915
  %v976 = vsub.f32 %v807, %v918
  %v977 = vsub.f32 %v810, %v921
  %v978 = vsub.f32 %v815, %v924
  %v979 = vsub.f32 %v818, %v927
  %v980 = vsub.f32 %v823, %v930
  %v981 = vsub.f32 %v826, %v933
  %v982 = vsub.f32 %v831, %v936
  %v983 = vsub.f32 %v834, %v939
  %v984 = vsub.f32 %v839, %v942
  %v985 = vsub.f32 %v842, %v945
  %v986 = vsub.f32 %v847, %v948
  %v987 = vsub.f32 %v850, %v951
  %v988 = vsub.f32 %v855, %v954
  %v989 = vsub.f32 %v858, %v957
  %v990 = vmul.f32 %v958, 1.442695
  %v991 = vpow.pop %v990
  %v992 = vmul.f32 %v959, 1.442695
  %v993 = vpow.pop %v992
  %v994 = vmul.f32 %v960, 1.442695
  %v995 = vpow.pop %v994
  %v996 = vmul.f32 %v961, 1.442695
  %v997 = vpow.pop %v996
  %v998 = vmul.f32 %v962, 1.442695
  %v999 = vpow.pop %v998
  %v1000 = vmul.f32 %v963, 1.442695
  %v1001 = vpow.pop %v1000
  %v1002 = vmul.f32 %v964, 1.442695
  %v1003 = vpow.pop %v1002
  %v1004 = vmul.f32 %v965, 1.442695
  %v1005 = vpow.pop %v1004
  %v1006 = vmul.f32 %v966, 1.442695
  %v1007 = vpow.pop %v1006
  %v1008 = vmul.f32 %v967, 1.442695
  %v1009 = vpow.pop %v1008
  %v1010 = vmul.f32 %v968, 1.442695
  %v1011 = vpow.pop %v1010
  %v1012 = vmul.f32 %v969, 1.442695
  %v1013 = vpow.pop %v1012
  %v1014 = vmul.f32 %v970, 1.442695
  %v1015 = vpow.pop %v1014
  %v1016 = vmul.f32 %v971, 1.442695
  %v1017 = vpow.pop %v1016
  %v1018 = vmul.f32 %v972, 1.442695
  %v1019 = vpow.pop %v1018
  %v1020 = vmul.f32 %v973, 1.442695
  %v1021 = vpow.pop %v1020
  %v1022 = vmul.f32 %v974, 1.442695
  %v1023 = vpow.pop %v1022
  %v1024 = vmul.f32 %v975, 1.442695
  %v1025 = vpow.pop %v1024
  %v1026 = vmul.f32 %v976, 1.442695
  %v1027 = vpow.pop %v1026
  %v1028 = vmul.f32 %v977, 1.442695
  %v1029 = vpow.pop %v1028
  %v1030 = vmul.f32 %v978, 1.442695
  %v1031 = vpow.pop %v1030
  %v1032 = vmul.f32 %v979, 1.442695
  %v1033 = vpow.pop %v1032
  %v1034 = vmul.f32 %v980, 1.442695
  %v1035 = vpow.pop %v1034
  %v1036 = vmul.f32 %v981, 1.442695
  %v1037 = vpow.pop %v1036
  %v1038 = vmul.f32 %v982, 1.442695
  %v1039 = vpow.pop %v1038
  %v1040 = vmul.f32 %v983, 1.442695
  %v1041 = vpow.pop %v1040
  %v1042 = vmul.f32 %v984, 1.442695
  %v1043 = vpow.pop %v1042
  %v1044 = vmul.f32 %v985, 1.442695
  %v1045 = vpow.pop %v1044
  %v1046 = vmul.f32 %v986, 1.442695
  %v1047 = vpow.pop %v1046
  %v1048 = vmul.f32 %v987, 1.442695
  %v1049 = vpow.pop %v1048
  %v1050 = vmul.f32 %v988, 1.442695
  %v1051 = vpow.pop %v1050
  %v1052 = vmul.f32 %v989, 1.442695
  %v1053 = vpow.pop %v1052
  %v1054 = vsel %vm861, %v991, 0.0
  %1055 = vadd.xlane.f32.xlu0 %v1054
  %v1056 = vpop.xlane.xlu0 %1055
  %v1057 = vsel %vm861, %v993, 0.0
  %1058 = vadd.xlane.f32.xlu0 %v1057
  %v1059 = vpop.xlane.xlu0 %1058
  %v1060 = vsel %vm861, %v995, 0.0
  %1061 = vadd.xlane.f32.xlu0 %v1060
  %v1062 = vpop.xlane.xlu0 %1061
  %v1063 = vsel %vm861, %v997, 0.0
  %1064 = vadd.xlane.f32.xlu0 %v1063
  %v1065 = vpop.xlane.xlu0 %1064
  %v1066 = vsel %vm861, %v999, 0.0
  %1067 = vadd.xlane.f32.xlu0 %v1066
  %v1068 = vpop.xlane.xlu0 %1067
  %v1069 = vsel %vm861, %v1001, 0.0
  %1070 = vadd.xlane.f32.xlu0 %v1069
  %v1071 = vpop.xlane.xlu0 %1070
  %v1072 = vsel %vm861, %v1003, 0.0
  %1073 = vadd.xlane.f32.xlu0 %v1072
  %v1074 = vpop.xlane.xlu0 %1073
  %v1075 = vsel %vm861, %v1005, 0.0
  %1076 = vadd.xlane.f32.xlu0 %v1075
  %v1077 = vpop.xlane.xlu0 %1076
  %v1078 = vsel %vm861, %v1007, 0.0
  %1079 = vadd.xlane.f32.xlu0 %v1078
  %v1080 = vpop.xlane.xlu0 %1079
  %v1081 = vsel %vm861, %v1009, 0.0
  %1082 = vadd.xlane.f32.xlu0 %v1081
  %v1083 = vpop.xlane.xlu0 %1082
  %v1084 = vsel %vm861, %v1011, 0.0
  %1085 = vadd.xlane.f32.xlu0 %v1084
  %v1086 = vpop.xlane.xlu0 %1085
  %v1087 = vsel %vm861, %v1013, 0.0
  %1088 = vadd.xlane.f32.xlu0 %v1087
  %v1089 = vpop.xlane.xlu0 %1088
  %v1090 = vsel %vm861, %v1015, 0.0
  %1091 = vadd.xlane.f32.xlu0 %v1090
  %v1092 = vpop.xlane.xlu0 %1091
  %v1093 = vsel %vm861, %v1017, 0.0
  %1094 = vadd.xlane.f32.xlu0 %v1093
  %v1095 = vpop.xlane.xlu0 %1094
  %v1096 = vsel %vm861, %v1019, 0.0
  %1097 = vadd.xlane.f32.xlu0 %v1096
  %v1098 = vpop.xlane.xlu0 %1097
  %v1099 = vsel %vm861, %v1021, 0.0
  %1100 = vadd.xlane.f32.xlu0 %v1099
  %v1101 = vpop.xlane.xlu0 %1100
  %v1102 = vsel %vm861, %v1023, 0.0
  %1103 = vadd.xlane.f32.xlu0 %v1102
  %v1104 = vpop.xlane.xlu0 %1103
  %v1105 = vsel %vm861, %v1025, 0.0
  %1106 = vadd.xlane.f32.xlu0 %v1105
  %v1107 = vpop.xlane.xlu0 %1106
  %v1108 = vsel %vm861, %v1027, 0.0
  %1109 = vadd.xlane.f32.xlu0 %v1108
  %v1110 = vpop.xlane.xlu0 %1109
  %v1111 = vsel %vm861, %v1029, 0.0
  %1112 = vadd.xlane.f32.xlu0 %v1111
  %v1113 = vpop.xlane.xlu0 %1112
  %v1114 = vsel %vm861, %v1031, 0.0
  %1115 = vadd.xlane.f32.xlu0 %v1114
  %v1116 = vpop.xlane.xlu0 %1115
  %v1117 = vsel %vm861, %v1033, 0.0
  %1118 = vadd.xlane.f32.xlu0 %v1117
  %v1119 = vpop.xlane.xlu0 %1118
  %v1120 = vsel %vm861, %v1035, 0.0
  %1121 = vadd.xlane.f32.xlu0 %v1120
  %v1122 = vpop.xlane.xlu0 %1121
  %v1123 = vsel %vm861, %v1037, 0.0
  %1124 = vadd.xlane.f32.xlu0 %v1123
  %v1125 = vpop.xlane.xlu0 %1124
  %v1126 = vsel %vm861, %v1039, 0.0
  %1127 = vadd.xlane.f32.xlu0 %v1126
  %v1128 = vpop.xlane.xlu0 %1127
  %v1129 = vsel %vm861, %v1041, 0.0
  %1130 = vadd.xlane.f32.xlu0 %v1129
  %v1131 = vpop.xlane.xlu0 %1130
  %v1132 = vsel %vm861, %v1043, 0.0
  %1133 = vadd.xlane.f32.xlu0 %v1132
  %v1134 = vpop.xlane.xlu0 %1133
  %v1135 = vsel %vm861, %v1045, 0.0
  %1136 = vadd.xlane.f32.xlu0 %v1135
  %v1137 = vpop.xlane.xlu0 %1136
  %v1138 = vsel %vm861, %v1047, 0.0
  %1139 = vadd.xlane.f32.xlu0 %v1138
  %v1140 = vpop.xlane.xlu0 %1139
  %v1141 = vsel %vm861, %v1049, 0.0
  %1142 = vadd.xlane.f32.xlu0 %v1141
  %v1143 = vpop.xlane.xlu0 %1142
  %v1144 = vsel %vm861, %v1051, 0.0
  %1145 = vadd.xlane.f32.xlu0 %v1144
  %v1146 = vpop.xlane.xlu0 %1145
  %v1147 = vsel %vm861, %v1053, 0.0
  %1148 = vadd.xlane.f32.xlu0 %v1147
  %v1149 = vpop.xlane.xlu0 %1148
  %v1150 = vrcp.pop %v1056
  %v1151 = vrcp.pop %v1059
  %v1152 = vrcp.pop %v1062
  %v1153 = vrcp.pop %v1065
  %v1154 = vrcp.pop %v1068
  %v1155 = vrcp.pop %v1071
  %v1156 = vrcp.pop %v1074
  %v1157 = vrcp.pop %v1077
  %v1158 = vrcp.pop %v1080
  %v1159 = vrcp.pop %v1083
  %v1160 = vrcp.pop %v1086
  %v1161 = vrcp.pop %v1089
  %v1162 = vrcp.pop %v1092
  %v1163 = vrcp.pop %v1095
  %v1164 = vrcp.pop %v1098
  %v1165 = vrcp.pop %v1101
  %v1166 = vrcp.pop %v1104
  %v1167 = vrcp.pop %v1107
  %v1168 = vrcp.pop %v1110
  %v1169 = vrcp.pop %v1113
  %v1170 = vrcp.pop %v1116
  %v1171 = vrcp.pop %v1119
  %v1172 = vrcp.pop %v1122
  %v1173 = vrcp.pop %v1125
  %v1174 = vrcp.pop %v1128
  %v1175 = vrcp.pop %v1131
  %v1176 = vrcp.pop %v1134
  %v1177 = vrcp.pop %v1137
  %v1178 = vrcp.pop %v1140
  %v1179 = vrcp.pop %v1143
  %v1180 = vrcp.pop %v1146
  %v1181 = vrcp.pop %v1149
  %v1182 = vmul.f32 %v991, %v1150
  %v1183 = vmul.f32 %v993, %v1151
  %v1184 = vmul.f32 %v995, %v1152
  %v1185 = vmul.f32 %v997, %v1153
  %v1186 = vmul.f32 %v999, %v1154
  %v1187 = vmul.f32 %v1001, %v1155
  %v1188 = vmul.f32 %v1003, %v1156
  %v1189 = vmul.f32 %v1005, %v1157
  %v1190 = vmul.f32 %v1007, %v1158
  %v1191 = vmul.f32 %v1009, %v1159
  %v1192 = vmul.f32 %v1011, %v1160
  %v1193 = vmul.f32 %v1013, %v1161
  %v1194 = vmul.f32 %v1015, %v1162
  %v1195 = vmul.f32 %v1017, %v1163
  %v1196 = vmul.f32 %v1019, %v1164
  %v1197 = vmul.f32 %v1021, %v1165
  %v1198 = vmul.f32 %v1023, %v1166
  %v1199 = vmul.f32 %v1025, %v1167
  %v1200 = vmul.f32 %v1027, %v1168
  %v1201 = vmul.f32 %v1029, %v1169
  %v1202 = vmul.f32 %v1031, %v1170
  %v1203 = vmul.f32 %v1033, %v1171
  %v1204 = vmul.f32 %v1035, %v1172
  %v1205 = vmul.f32 %v1037, %v1173
  %v1206 = vmul.f32 %v1039, %v1174
  %v1207 = vmul.f32 %v1041, %v1175
  %v1208 = vmul.f32 %v1043, %v1176
  %v1209 = vmul.f32 %v1045, %v1177
  %v1210 = vmul.f32 %v1047, %v1178
  %v1211 = vmul.f32 %v1049, %v1179
  %v1212 = vmul.f32 %v1051, %v1180
  %v1213 = vmul.f32 %v1053, %v1181
  %1214 = vst.msk [vmem:[%s7] sm:$0xff] %vm861, %v1182
  %1215 = vst.msk [vmem:[%s7 + $0x8] sm:$0xff] %vm861, %v1183
  %1216 = vst.msk [vmem:[%s7 + $0x10] sm:$0xff] %vm861, %v1184
  %1217 = vst.msk [vmem:[%s7 + $0x18] sm:$0xff] %vm861, %v1185
  %1218 = vst.msk [vmem:[%s7 + $0x20] sm:$0xff] %vm861, %v1186
  %1219 = vst.msk [vmem:[%s7 + $0x28] sm:$0xff] %vm861, %v1187
  %1220 = vst.msk [vmem:[%s7 + $0x30] sm:$0xff] %vm861, %v1188
  %1221 = vst.msk [vmem:[%s7 + $0x38] sm:$0xff] %vm861, %v1189
  %1222 = vst.msk [vmem:[%s7 + $0x40] sm:$0xff] %vm861, %v1190
  %1223 = vst.msk [vmem:[%s7 + $0x48] sm:$0xff] %vm861, %v1191
  %1224 = vst.msk [vmem:[%s7 + $0x50] sm:$0xff] %vm861, %v1192
  %1225 = vst.msk [vmem:[%s7 + $0x58] sm:$0xff] %vm861, %v1193
  %1226 = vst.msk [vmem:[%s7 + $0x60] sm:$0xff] %vm861, %v1194
  %1227 = vst.msk [vmem:[%s7 + $0x68] sm:$0xff] %vm861, %v1195
  %1228 = vst.msk [vmem:[%s7 + $0x70] sm:$0xff] %vm861, %v1196
  %1229 = vst.msk [vmem:[%s7 + $0x78] sm:$0xff] %vm861, %v1197
  %1230 = vst.msk [vmem:[%s7 + $0x80] sm:$0xff] %vm861, %v1198
  %1231 = vst.msk [vmem:[%s7 + $0x88] sm:$0xff] %vm861, %v1199
  %1232 = vst.msk [vmem:[%s7 + $0x90] sm:$0xff] %vm861, %v1200
  %1233 = vst.msk [vmem:[%s7 + $0x98] sm:$0xff] %vm861, %v1201
  %1234 = vst.msk [vmem:[%s7 + $0xa0] sm:$0xff] %vm861, %v1202
  %1235 = vst.msk [vmem:[%s7 + $0xa8] sm:$0xff] %vm861, %v1203
  %1236 = vst.msk [vmem:[%s7 + $0xb0] sm:$0xff] %vm861, %v1204
  %1237 = vst.msk [vmem:[%s7 + $0xb8] sm:$0xff] %vm861, %v1205
  %1238 = vst.msk [vmem:[%s7 + $0xc0] sm:$0xff] %vm861, %v1206
  %1239 = vst.msk [vmem:[%s7 + $0xc8] sm:$0xff] %vm861, %v1207
  %1240 = vst.msk [vmem:[%s7 + $0xd0] sm:$0xff] %vm861, %v1208
  %1241 = vst.msk [vmem:[%s7 + $0xd8] sm:$0xff] %vm861, %v1209
  %1242 = vst.msk [vmem:[%s7 + $0xe0] sm:$0xff] %vm861, %v1210
  %1243 = vst.msk [vmem:[%s7 + $0xe8] sm:$0xff] %vm861, %v1211
  %1244 = vst.msk [vmem:[%s7 + $0xf0] sm:$0xff] %vm861, %v1212
  %1245 = vst.msk [vmem:[%s7 + $0xf8] sm:$0xff] %vm861, %v1213
  // Predicated region
  $region30: #{tpu_custom_call.1} parent=0 // pred_check
    _
  $region31: #{tpu_custom_call.1} parent=0 // pred_check_branch
    %1247 = sbr.rel (0) target = $region33
  $region32: #{tpu_custom_call.1} parent=0 // pred_region
    _
  $region33: #{tpu_custom_call.1} parent=0 // pred_fallthru
    _
  // Predicated region
  $region34: #{tpu_custom_call.1} parent=0 // pred_check
    _
  $region35: #{tpu_custom_call.1} parent=0 // pred_check_branch
    %1249 = sbr.rel (0) target = $region37
  $region36: #{tpu_custom_call.1} parent=0 // pred_region
    _
  $region37: #{tpu_custom_call.1} parent=0 // pred_fallthru
    _

</llo_original>
